<compile_context>
chip_gen: v7x
topology: tpu7x:2x2x1
jax: 0.10.0
libtpu: 0.0.40
codegen_flags: <defaults>
</compile_context>

<pallas_src>
import functools

import numpy as np
import jax
import jax.numpy as jnp
from jax.experimental import pallas as pl
from jax.experimental.pallas import tpu as pltpu


def _pick_tile(total, cap):
    """Largest multiple of 128 <= cap that divides total (or total itself)."""
    if total <= cap:
        return total
    for t in range(cap, 127, -128):
        if total % t == 0:
            return t
    return total


# ----------------------------------------------------------------------------
# Conv3d(k=3, pad=1) + folded BatchNorm + ReLU  (single K=27*Cin matmul)
# ----------------------------------------------------------------------------
def _conv_bn_relu_kernel(x_ref, w_ref, shift_ref, o_ref):
    # x_ref: (27*Cin, tL) im2col columns; w_ref: (Cout, 27*Cin) (BN scale folded)
    y = jnp.dot(w_ref[...], x_ref[...], preferred_element_type=jnp.float32)
    o_ref[...] = jnp.maximum(y + shift_ref[...], 0.0).astype(o_ref.dtype)


def _conv_bn_relu_pool_kernel(x_ref, w_ref, shift_ref, o_ref):
    # Last grid axis runs over pool-window offsets; the output block (constant
    # over that axis) max-accumulates the raw matmul.  Bias + ReLU commute with
    # the max (bias is offset-independent, ReLU monotone) so they are applied
    # once at the final pool offset.
    y = jnp.dot(w_ref[...], x_ref[...], preferred_element_type=jnp.float32)
    p = pl.program_id(1)

    @pl.when(p == 0)
    def _():
        o_ref[...] = y

    @pl.when(p > 0)
    def _():
        o_ref[...] = jnp.maximum(o_ref[...], y)

    @pl.when(p == pl.num_programs(1) - 1)
    def _():
        o_ref[...] = jnp.maximum(o_ref[...] + shift_ref[...], 0.0)


def conv3d_bn_relu(x, w, scale, shift, pool=None):
    """x: (N,Cin,D,H,W); w: (3,3,3,Cin,Cout); scale/shift: (Cout,).

    If pool=(pd,ph,pw), MaxPool3d is fused into the conv epilogue and the
    returned tensor is already pooled.
    """
    N, Cin, D, H, W = x.shape
    Cout = w.shape[-1]
    KC = 27 * Cin

    # Fold BN scale into the weight rows: scale*(W.x) + shift == (scale*W).x + shift
    w2 = (jnp.transpose(w.reshape(KC, Cout)) *
          scale.reshape(Cout, 1)).astype(jnp.float32)        # (Cout, 27*Cin)
    shift2 = shift.reshape(Cout, 1).astype(jnp.float32)

    # im2col: stack the 27 shifted (zero-padded) windows along the channel dim.
    xpad = jnp.pad(x, ((0, 0), (0, 0), (1, 1), (1, 1), (1, 1)))
    taps = [xpad[:, :, kd:kd + D, kh:kh + H, kw:kw + W]
            for kd in range(3) for kh in range(3) for kw in range(3)]
    col = jnp.stack(taps, axis=1).reshape(N, KC, D, H, W)

    if pool is None:
        L = D * H * W
        NL = N * L
        tL = _pick_tile(NL, 2048)
        # Batch folded into the lane axis -> lane-dense output blocks.
        xcol = jnp.transpose(col, (1, 0, 2, 3, 4)).reshape(KC, NL)
        cost = pl.CostEstimate(
            flops=2 * Cout * KC * NL, transcendentals=0,
            bytes_accessed=4 * (xcol.size + w2.size + Cout * NL + Cout))
        out = pl.pallas_call(
            _conv_bn_relu_kernel,
            out_shape=jax.ShapeDtypeStruct((Cout, NL), jnp.float32),
            grid=(NL // tL,),
            in_specs=[
                pl.BlockSpec((KC, tL), lambda l: (0, l)),
                pl.BlockSpec((Cout, KC), lambda l: (0, 0)),
                pl.BlockSpec((Cout, 1), lambda l: (0, 0)),
            ],
            out_specs=pl.BlockSpec((Cout, tL), lambda l: (0, l)),
            compiler_params=pltpu.CompilerParams(
                dimension_semantics=("parallel",)),
            cost_estimate=cost,
        )(xcol, w2, shift2)
        return jnp.transpose(out.reshape(Cout, N, D, H, W), (1, 0, 2, 3, 4))

    # Fused conv + maxpool: order columns pool-offset-major so pooling is a
    # max over a trailing grid axis with a resident output block.
    pd, ph, pw = pool
    assert D % pd == 0 and H % ph == 0 and W % pw == 0
    Do, Ho, Wo = D // pd, H // ph, W // pw
    P = pd * ph * pw
    S = Do * Ho * Wo
    NS = N * S
    tS = _pick_tile(NS, 2048)
    colp = col.reshape(N, KC, Do, pd, Ho, ph, Wo, pw)
    colp = jnp.transpose(colp, (3, 5, 7, 1, 0, 2, 4, 6)).reshape(P, KC, NS)
    cost = pl.CostEstimate(
        flops=2 * Cout * KC * P * NS, transcendentals=0,
        bytes_accessed=4 * (colp.size + w2.size + Cout * NS + Cout))
    out = pl.pallas_call(
        _conv_bn_relu_pool_kernel,
        out_shape=jax.ShapeDtypeStruct((Cout, NS), jnp.float32),
        grid=(NS // tS, P),
        in_specs=[
            pl.BlockSpec((None, KC, tS), lambda s, p: (p, 0, s)),
            pl.BlockSpec((Cout, KC), lambda s, p: (0, 0)),
            pl.BlockSpec((Cout, 1), lambda s, p: (0, 0)),
        ],
        out_specs=pl.BlockSpec((Cout, tS), lambda s, p: (0, s)),
        compiler_params=pltpu.CompilerParams(
            dimension_semantics=("parallel", "arbitrary")),
        cost_estimate=cost,
    )(colp, w2, shift2)
    return jnp.transpose(out.reshape(Cout, N, Do, Ho, Wo), (1, 0, 2, 3, 4))


# ----------------------------------------------------------------------------
# Linear (+ optional ReLU): K-tiled, accumulates directly into the output block
# ----------------------------------------------------------------------------
def _linear_kernel(x_ref, w_ref, b_ref, o_ref, *, apply_relu):
    k = pl.program_id(1)

    @pl.when(k == 0)
    def _():
        o_ref[...] = jnp.zeros_like(o_ref)

    o_ref[...] += jnp.dot(x_ref[...], w_ref[...],
                          preferred_element_type=jnp.float32)

    @pl.when(k == pl.num_programs(1) - 1)
    def _():
        y = o_ref[...] + b_ref[...]
        if apply_relu:
            y = jnp.maximum(y, 0.0)
        o_ref[...] = y


def linear(x, w, b, apply_relu):
    """x: (M, K); w: (K, N); b: (N,)."""
    M, K = x.shape
    _, N = w.shape
    Np = N
    if N < 128:                      # tiny final layer: pad to one lane tile
        Np = 128
        w = jnp.pad(w, ((0, 0), (0, Np - N)))
        b = jnp.pad(b, (0, Np - N))
    tn = _pick_tile(Np, 1024)        # 1024x1024 f32 tile: 4 MiB, 2-buffered 8 MiB
    tk = _pick_tile(K, 1024)         # -> safe for v7x 64 MiB VMEM
    kernel = functools.partial(_linear_kernel, apply_relu=apply_relu)
    cost = pl.CostEstimate(flops=2 * M * K * Np, transcendentals=0,
                           bytes_accessed=4 * (M * K + K * Np + M * Np + Np))
    out = pl.pallas_call(
        kernel,
        out_shape=jax.ShapeDtypeStruct((M, Np), jnp.float32),
        grid=(Np // tn, K // tk),
        in_specs=[
            pl.BlockSpec((M, tk), lambda j, k: (0, k)),
            pl.BlockSpec((tk, tn), lambda j, k: (k, j)),
            pl.BlockSpec((1, tn), lambda j, k: (0, j)),
        ],
        out_specs=pl.BlockSpec((M, tn), lambda j, k: (0, j)),
        compiler_params=pltpu.CompilerParams(
            dimension_semantics=("parallel", "arbitrary")),
        cost_estimate=cost,
    )(x, w, b.reshape(1, Np))
    return out[:, :N] if Np != N else out


# ----------------------------------------------------------------------------
# Parameter construction (mirrors Vgg3D.__init__ shape logic, synthetic init)
# ----------------------------------------------------------------------------
def build_params(key, input_size, fmaps, downsample_factors, fmap_inc,
                 n_convolutions, output_classes, input_fmaps):
    assert len(downsample_factors) == len(fmap_inc) == len(n_convolutions)
    kit = iter(jax.random.split(key, 64))
    features = []
    current_fmaps = input_fmaps
    current_size = np.array(input_size, dtype=np.int64)
    f = fmaps
    eps = 1e-5
    for i, (df, nc) in enumerate(zip(downsample_factors, n_convolutions)):
        cin = current_fmaps
        for j in range(nc):
            w = 0.1 * jax.random.normal(next(kit), (3, 3, 3, cin, f), jnp.float32)
            gamma = 1.0 + 0.1 * jax.random.normal(next(kit), (f,), jnp.float32)
            beta = 0.1 * jax.random.normal(next(kit), (f,), jnp.float32)
            r_mean = 0.1 * jax.random.normal(next(kit), (f,), jnp.float32)
            r_var = 1.0 + jax.random.uniform(next(kit), (f,), jnp.float32)
            scale = gamma / jnp.sqrt(r_var + eps)       # folded eval-mode BN
            shift = beta - r_mean * scale
            pool = tuple(df) if j == nc - 1 else None   # MaxPool after last conv
            features.append((w, scale, shift, pool))
            cin = f
        current_fmaps = f
        f = f * fmap_inc[i]
        current_size = current_size // np.array(df)
    flat_dim = int(np.prod(current_size)) * current_fmaps
    dims = [flat_dim, 4096, 4096, output_classes]       # classifier as in module
    classifier = []
    for din, dout in zip(dims[:-1], dims[1:]):
        w = (1.0 / np.sqrt(din)) * jax.random.normal(next(kit), (din, dout),
                                                     jnp.float32)
        b = 0.01 * jax.random.normal(next(kit), (dout,), jnp.float32)
        classifier.append((w, b))
    return features, classifier


# ----------------------------------------------------------------------------
# Forward (Pallas) and pure-JAX reference
# ----------------------------------------------------------------------------
def vgg3d_forward(x, features, classifier):
    for (w, scale, shift, pool) in features:
        x = conv3d_bn_relu(x, w, scale, shift, pool=pool)
    x = x.reshape(x.shape[0], -1)            # NCDHW flatten == PyTorch .view
    n_lin = len(classifier)
    for idx, (w, b) in enumerate(classifier):
        # TODO(synk): Dropout is identity in eval mode (deterministic inference).
        x = linear(x, w, b, apply_relu=(idx < n_lin - 1))
    return x


def vgg3d_reference(x, features, classifier):
    for (w, scale, shift, pool) in features:
        w_oidhw = jnp.transpose(w, (4, 3, 0, 1, 2))
        y = jax.lax.conv_general_dilated(
            x, w_oidhw, window_strides=(1, 1, 1),
            padding=((1, 1), (1, 1), (1, 1)),
            dimension_numbers=("NCDHW", "OIDHW", "NCDHW"))
        y = y * scale[None, :, None, None, None] + shift[None, :, None, None, None]
        x = jnp.maximum(y, 0.0)
        if pool is not None:
            pd, ph, pw = pool
            N, C, D, H, W = x.shape
            x = x.reshape(N, C, D // pd, pd, H // ph, ph, W // pw, pw).max(
                axis=(3, 5, 7))
    x = x.reshape(x.shape[0], -1)
    for idx, (w, b) in enumerate(classifier):
        x = x @ w + b
        if idx < len(classifier) - 1:
            x = jnp.maximum(x, 0.0)
    return x


if __name__ == "__main__":
    key = jax.random.PRNGKey(0)
    kp, kx = jax.random.split(key)
    cfg = dict(input_size=(16, 16, 16), fmaps=8,
               downsample_factors=[(2, 2, 2), (2, 2, 2)],
               fmap_inc=(2, 2), n_convolutions=(2, 1),
               output_classes=7, input_fmaps=1)
    features, classifier = build_params(kp, **cfg)
    x = jax.random.normal(kx, (2, cfg["input_fmaps"], *cfg["input_size"]),
                          jnp.float32)

    out = jax.block_until_ready(vgg3d_forward(x, features, classifier))
    assert out.shape == (2, cfg["output_classes"])

    ref = jax.block_until_ready(vgg3d_reference(x, features, classifier))
    np.testing.assert_allclose(np.asarray(out), np.asarray(ref),
                               rtol=2e-3, atol=2e-3)
    print("KERNEL_OK")
</pallas_src>

<mosaic_0001>
module attributes {stable_mosaic.version = 11 : i64} {
  func.func @_conv_bn_relu_kernel(%arg0: i32, %arg1: memref<27x2048xf32, #tpu.memory_space<vmem>>, %arg2: memref<8x27xf32, #tpu.memory_space<vmem>>, %arg3: memref<8x1xf32, #tpu.memory_space<vmem>>, %arg4: memref<8x2048xf32, #tpu.memory_space<vmem>>) attributes {dimension_semantics = [#tpu.dimension_semantics<parallel>], iteration_bounds = array<i64: 4>, scalar_prefetch = 0 : i64, scratch_operands = 0 : i64, tpu.core_type = #tpu.core_type<tc>, window_params = [{transform_indices = @transform_0, window_bounds = array<i64: 27, 2048>}, {pipeline_mode = #tpu.pipeline_mode<synchronous>, transform_indices = @transform_1, window_bounds = array<i64: 8, 27>}, {pipeline_mode = #tpu.pipeline_mode<synchronous>, transform_indices = @transform_2, window_bounds = array<i64: 8, 1>}, {transform_indices = @transform_3, window_bounds = array<i64: 8, 2048>}]} {
    %c0 = arith.constant 0 : index
    %c0_0 = arith.constant 0 : index
    %0 = vector.load %arg2[%c0, %c0_0] : memref<8x27xf32, #tpu.memory_space<vmem>>, vector<8x27xf32>
    %c0_1 = arith.constant 0 : index
    %c0_2 = arith.constant 0 : index
    %1 = vector.load %arg1[%c0_1, %c0_2] : memref<27x2048xf32, #tpu.memory_space<vmem>>, vector<27x2048xf32>
    %cst = arith.constant dense<0.000000e+00> : vector<8x2048xf32>
    %2 = tpu.matmul %0, %1, %cst {dimension_numbers = #tpu.dot_dimension_numbers<[1], [0], [0], [1], [0, 0, 1, 1], [], []>} : vector<8x27xf32>, vector<27x2048xf32>, vector<8x2048xf32> -> vector<8x2048xf32>
    %c0_3 = arith.constant 0 : index
    %c0_4 = arith.constant 0 : index
    %3 = vector.load %arg3[%c0_3, %c0_4] : memref<8x1xf32, #tpu.memory_space<vmem>>, vector<8x1xf32>
    %4 = vector.broadcast %3 : vector<8x1xf32> to vector<8x2048xf32>
    %5 = arith.addf %2, %4 : vector<8x2048xf32>
    %cst_5 = arith.constant 0.000000e+00 : f32
    %6 = vector.broadcast %cst_5 : f32 to vector<8x2048xf32>
    %7 = arith.maximumf %5, %6 : vector<8x2048xf32>
    %c0_6 = arith.constant 0 : index
    %c0_7 = arith.constant 0 : index
    %8 = vector.load %arg4[%c0_6, %c0_7] : memref<8x2048xf32, #tpu.memory_space<vmem>>, vector<8x2048xf32>
    tpu.vector_store %arg4[%c0_6, %c0_7], %7 {strides = array<i32>} : memref<8x2048xf32, #tpu.memory_space<vmem>>, vector<8x2048xf32>,
    return
  }
  func.func @transform_0(%arg0: i32) -> (i32, i32) {
    %c0_i32 = arith.constant 0 : i32
    %c0_i32_0 = arith.constant 0 : i32
    return %c0_i32, %arg0 : i32, i32
  }
  func.func @transform_1(%arg0: i32) -> (i32, i32) {
    %c0_i32 = arith.constant 0 : i32
    %c0_i32_0 = arith.constant 0 : i32
    %c0_i32_1 = arith.constant 0 : i32
    return %c0_i32, %c0_i32_0 : i32, i32
  }
  func.func @transform_2(%arg0: i32) -> (i32, i32) {
    %c0_i32 = arith.constant 0 : i32
    %c0_i32_0 = arith.constant 0 : i32
    %c0_i32_1 = arith.constant 0 : i32
    return %c0_i32, %c0_i32_0 : i32, i32
  }
  func.func @transform_3(%arg0: i32) -> (i32, i32) {
    %c0_i32 = arith.constant 0 : i32
    %c0_i32_0 = arith.constant 0 : i32
    return %c0_i32, %arg0 : i32, i32
  }
}

</mosaic_0001>

<llo_original>
// kernel: tpu_custom_call.1
$region0: #{tpu_custom_call.1}
  #allocation0 [shape = 'u32[]', space=smem, size = 0x4, offset = 0x4, fixed_abs, tag = 'smem constant byte address 0x4 - core index']
  #allocation1 [shape = 'u32[144,128]{1,0:T(1,128)}', space=vmem, size = 0x12000, scoped, tag = 'internal scratch']
  %s0 = inlined_call_operand.hbm [shape: f32[27,8192], index: 0, kind: input, shape index: {}]
  %s1 = inlined_call_operand.vmem [shape: f32[8,27], index: 1, kind: input, shape index: {}]
  %s2 = inlined_call_operand.vmem [shape: f32[8,1], index: 2, kind: input, shape index: {}]
  %s3 = inlined_call_operand.hbm [shape: f32[8,8192], index: 3, kind: output, shape index: {}]
  %s4 = sld [smem:[#allocation0]]
  $region49: #{tpu_custom_call.1} parent=0
    _
  %s6 = ssub.s32 1, %s4
  %s7 = scalar_select 0, %s6, %s4
  $region1: #{tpu_custom_call.1} parent=0
    #allocation2 [shape = 'u8[524288]{0}', space=vmem, size = 0x80000, scoped, tag = 'input window, operand 0']
    #allocation3 [shape = 's32[2]{0}', space=sflag, size = 0x8, scoped, tag = 'scoped memory for tpu_custom_call.1']
    #allocation4 [shape = 's32[2]{0}', space=sflag, size = 0x8, scoped, tag = 'scoped memory for tpu_custom_call.1']
    #allocation5 [shape = 'u8[131072]{0}', space=vmem, size = 0x20000, scoped, tag = 'output window, operand 0']
    %8 = vsyncpa [#allocation3], 0
    %s9 = scalar_lea.sflag [#allocation3], 1
    %10 = vsyncpa %s9, 0
    %11 = vsyncpa [#allocation4], 0
    %s12 = scalar_lea.sflag [#allocation4], 1
    %13 = vsyncpa %s12, 0
    loop: start=0, step=1, limit=6
    $region2: #{tpu_custom_call.1} parent=1 // loop_pre_header
      _
    $region3: #{tpu_custom_call.1} parent=1 // loop_header
      %s15 = sphi 0, %s19
      %p16 = scmp.ge.s32.totalorder %s15, 6
      %s25 = sphi 0, %s27
      %s28 = sphi 0, %s25
      %s29 = sphi 0, %s28
      %s45 = sphi 0, %s29
      %s49 = sphi 0, %s49
      %s51 = sphi 0, %s49
      %s52 = sphi 0, %s51
      %s66 = sphi 0, %s52
      %s70 = sphi 0, %s70
      %s72 = sphi 0, %s70
      %s73 = sphi 0, %s72
      %s87 = sphi 0, %s73
      %s93 = sphi 0, %s95
      %s96 = sphi 0, %s93
      %s97 = sphi 0, %s96
      %s113 = sphi 0, %s97
    $region4: #{tpu_custom_call.1} parent=1 // loop_header_branch
      %18 = sbr.rel (%p16) target = $region8
    $region5: #{tpu_custom_call.1} parent=1 // loop_body
      %s20 = ssub.s32 %s15, 1
      %s21 = ssub.s32 %s15, 2
      %s22 = sadd.s32 %s15, 1
      %s23 = ssub.s32 %s15, %s22
      %p24 = scmp.eq.s32.totalorder %s23, 0
      %s26 = sadd.s32 %s25, 1
      %s27 = scalar_select %p24, %s25, %s26
      %p30 = pneg %p24
      %p31 = scmp.eq.s32.totalorder %s15, 3
      %p32 = por %p30, %p31
      %p33 = scmp.ne.s32.totalorder %s25, %s28
      %p34 = scmp.eq.s32.totalorder %s15, 0
      %p35 = por %p33, %p34
      %p36 = scmp.ne.s32.totalorder %s25, %s28
      %p37 = scmp.eq.s32.totalorder %s20, 3
      %p38 = por %p36, %p37
      %p39 = scmp.ne.s32.totalorder %s28, %s29
      %p40 = scmp.eq.s32.totalorder %s20, 0
      %p41 = por %p39, %p40
      %p42 = scmp.ne.s32.totalorder %s28, %s29
      %p43 = scmp.eq.s32.totalorder %s21, 3
      %p44 = por %p42, %p43
      %p46 = scmp.ne.s32.totalorder %s29, %s45
      %p47 = scmp.eq.s32.totalorder %s21, 0
      %p48 = por %p46, %p47
      %s50 = sadd.s32 %s49, 1
      %p53 = scmp.eq.s32.totalorder %s15, 3
      %p54 = scmp.ne.s32.totalorder %s49, %s51
      %p55 = scmp.eq.s32.totalorder %s15, 0
      %p56 = por %p54, %p55
      %p57 = scmp.ne.s32.totalorder %s49, %s51
      %p58 = scmp.eq.s32.totalorder %s20, 3
      %p59 = por %p57, %p58
      %p60 = scmp.ne.s32.totalorder %s51, %s52
      %p61 = scmp.eq.s32.totalorder %s20, 0
      %p62 = por %p60, %p61
      %p63 = scmp.ne.s32.totalorder %s51, %s52
      %p64 = scmp.eq.s32.totalorder %s21, 3
      %p65 = por %p63, %p64
      %p67 = scmp.ne.s32.totalorder %s52, %s66
      %p68 = scmp.eq.s32.totalorder %s21, 0
      %p69 = por %p67, %p68
      %s71 = sadd.s32 %s70, 1
      %p74 = scmp.eq.s32.totalorder %s15, 3
      %p75 = scmp.ne.s32.totalorder %s70, %s72
      %p76 = scmp.eq.s32.totalorder %s15, 0
      %p77 = por %p75, %p76
      %p78 = scmp.ne.s32.totalorder %s70, %s72
      %p79 = scmp.eq.s32.totalorder %s20, 3
      %p80 = por %p78, %p79
      %p81 = scmp.ne.s32.totalorder %s72, %s73
      %p82 = scmp.eq.s32.totalorder %s20, 0
      %p83 = por %p81, %p82
      %p84 = scmp.ne.s32.totalorder %s72, %s73
      %p85 = scmp.eq.s32.totalorder %s21, 3
      %p86 = por %p84, %p85
      %p88 = scmp.ne.s32.totalorder %s73, %s87
      %p89 = scmp.eq.s32.totalorder %s21, 0
      %p90 = por %p88, %p89
      %s91 = ssub.s32 %s15, %s22
      %p92 = scmp.eq.s32.totalorder %s91, 0
      %s94 = sadd.s32 %s93, 1
      %s95 = scalar_select %p92, %s93, %s94
      %p98 = pneg %p92
      %p99 = scmp.eq.s32.totalorder %s15, 3
      %p100 = por %p98, %p99
      %p101 = scmp.ne.s32.totalorder %s93, %s96
      %p102 = scmp.eq.s32.totalorder %s15, 0
      %p103 = por %p101, %p102
      %p104 = scmp.ne.s32.totalorder %s93, %s96
      %p105 = scmp.eq.s32.totalorder %s20, 3
      %p106 = por %p104, %p105
      %p107 = scmp.ne.s32.totalorder %s96, %s97
      %p108 = scmp.eq.s32.totalorder %s20, 0
      %p109 = por %p107, %p108
      %p110 = scmp.ne.s32.totalorder %s96, %s97
      %p111 = scmp.eq.s32.totalorder %s21, 3
      %p112 = por %p110, %p111
      %p114 = scmp.ne.s32.totalorder %s97, %s113
      %p115 = scmp.eq.s32.totalorder %s21, 0
      %p116 = por %p114, %p115
      %p117 = scmp.le.s32.totalorder 1, %s15
      %p118 = scmp.lt.s32.totalorder %s15, 5
      %p119 = pnand %p117, %p118
      %p120 = pneg %p119
      // Predicated region
      $region9: #{tpu_custom_call.1} parent=5 // pred_check
        _
      $region10: #{tpu_custom_call.1} parent=5 // pred_check_branch
        %122 = sbr.rel (%p119) target = $region12
      $region11: #{tpu_custom_call.1} parent=5 // pred_region
        %s123 = ssub.s32 %s15, 1
        // Predicated region
        $region13: #{tpu_custom_call.1} parent=11 // pred_check
          %p124 = pneg %p62
        $region14: #{tpu_custom_call.1} parent=11 // pred_check_branch
          %126 = sbr.rel (%p124) target = $region16
        $region15: #{tpu_custom_call.1} parent=11 // pred_region
          _
        $region16: #{tpu_custom_call.1} parent=11 // pred_fallthru
          _
        // Predicated region
        $region17: #{tpu_custom_call.1} parent=11 // pred_check
          %p127 = pneg %p83
        $region18: #{tpu_custom_call.1} parent=11 // pred_check_branch
          %129 = sbr.rel (%p127) target = $region20
        $region19: #{tpu_custom_call.1} parent=11 // pred_region
          _
        $region20: #{tpu_custom_call.1} parent=11 // pred_fallthru
          _
      $region12: #{tpu_custom_call.1} parent=5 // pred_fallthru
        _
      %p130 = scmp.lt.s32.totalorder %s15, 4
      // Predicated region
      $region21: #{tpu_custom_call.1} parent=5 // pred_check
        %p131 = pneg %p130
      $region22: #{tpu_custom_call.1} parent=5 // pred_check_branch
        %133 = sbr.rel (%p131) target = $region24
      $region23: #{tpu_custom_call.1} parent=5 // pred_region
        // Predicated region
        $region25: #{tpu_custom_call.1} parent=23 // pred_check
          %p134 = pneg %p35
        $region26: #{tpu_custom_call.1} parent=23 // pred_check_branch
          %136 = sbr.rel (%p134) target = $region28
        $region27: #{tpu_custom_call.1} parent=23 // pred_region
          %s137 = sand.u32 %s25, 1
          %s138 = scalar_lea.sflag [#allocation3], %s137
          %s139 = sand.u32 %s25, 1
          %s140 = smul.addr %s139, 512
          %s141 = scalar_lea.vmem [#allocation2], %s140
          %s142 = smul.u32 16, %s15
          %s144 = ssub.s32 8192, 8192
          %145 = vsyncadd %s138, %s144
          %s146 = smul.addr %s142, 128
          %s147 = scalar_lea.hbm %s0, %s146
          %s148 = sshll.u32 %s141, 4
          %s149 = int_to_ptr.vmem [resolvable:$true] %s148
          %154 = dma.hbm_to_vmem [thread:$0]  %s147, 8192, %s149, %s138, 8192, 2048, 128
        $region28: #{tpu_custom_call.1} parent=23 // pred_fallthru
          _
      $region24: #{tpu_custom_call.1} parent=5 // pred_fallthru
        _
      %p155 = scmp.le.s32.totalorder 1, %s15
      %p156 = scmp.lt.s32.totalorder %s15, 5
      %p157 = pnand %p155, %p156
      %p158 = pneg %p157
      // Predicated region
      $region29: #{tpu_custom_call.1} parent=5 // pred_check
        _
      $region30: #{tpu_custom_call.1} parent=5 // pred_check_branch
        %160 = sbr.rel (%p157) target = $region32
      $region31: #{tpu_custom_call.1} parent=5 // pred_region
        %s161 = ssub.s32 %s15, 1
        %s162 = sand.u32 %s28, 1
        %s163 = scalar_lea.sflag [#allocation3], %s162
        %s164 = sand.u32 %s28, 1
        %s165 = smul.addr %s164, 512
        %s166 = scalar_lea.vmem [#allocation2], %s165
        // Predicated region
        $region33: #{tpu_custom_call.1} parent=31 // pred_check
          %p167 = pneg %p41
        $region34: #{tpu_custom_call.1} parent=31 // pred_check_branch
          %169 = sbr.rel (%p167) target = $region36
        $region35: #{tpu_custom_call.1} parent=31 // pred_region
          %170 = dma.done %s163, 8192
        $region36: #{tpu_custom_call.1} parent=31 // pred_fallthru
          _
        %s171 = sand.u32 %s28, 1
        %s172 = scalar_lea.sflag [#allocation3], %s171
        %s173 = sand.u32 %s28, 1
        %s174 = smul.addr %s173, 512
        %s175 = scalar_lea.vmem [#allocation2], %s174
        %p176 = pneg %p41
        %p177 = pneg %p38
        %p178 = pneg %p62
        %p179 = pneg %p59
        %p180 = pneg %p83
        %p181 = pneg %p80
        %p182 = pneg %p109
        %p183 = pneg %p106
        %s184 = sand.u32 %s96, 1
        %s185 = scalar_lea.sflag [#allocation4], %s184
        %s186 = sand.u32 %s96, 1
        %s187 = smul.addr %s186, 128
        %s188 = scalar_lea.vmem [#allocation5], %s187
        %s189 = smul.u32 16, %s20
        %s190 = smul.u32 16, %s20
        %v191 = vld [vmem:[%s1] sm:$0xff]
        %v192 = vld [vmem:[%s166] sm:$0xff]
        %v193 = vld [vmem:[%s166 + $0x8] sm:$0xff]
        %v194 = vld [vmem:[%s166 + $0x10] sm:$0xff]
        %v195 = vld [vmem:[%s166 + $0x18] sm:$0xff]
        %v196 = vld [vmem:[%s166 + $0x20] sm:$0xff]
        %v197 = vld [vmem:[%s166 + $0x28] sm:$0xff]
        %v198 = vld [vmem:[%s166 + $0x30] sm:$0xff]
        %v199 = vld [vmem:[%s166 + $0x38] sm:$0xff]
        %v200 = vld [vmem:[%s166 + $0x40] sm:$0xff]
        %v201 = vld [vmem:[%s166 + $0x48] sm:$0xff]
        %v202 = vld [vmem:[%s166 + $0x50] sm:$0xff]
        %v203 = vld [vmem:[%s166 + $0x58] sm:$0xff]
        %v204 = vld [vmem:[%s166 + $0x60] sm:$0xff]
        %v205 = vld [vmem:[%s166 + $0x68] sm:$0xff]
        %v206 = vld [vmem:[%s166 + $0x70] sm:$0xff]
        %v207 = vld [vmem:[%s166 + $0x78] sm:$0xff]
        %v208 = vld [vmem:[%s166 + $0x80] sm:$0xff]
        %v209 = vld [vmem:[%s166 + $0x88] sm:$0xff]
        %v210 = vld [vmem:[%s166 + $0x90] sm:$0xff]
        %v211 = vld [vmem:[%s166 + $0x98] sm:$0xff]
        %v212 = vld [vmem:[%s166 + $0xa0] sm:$0xff]
        %v213 = vld [vmem:[%s166 + $0xa8] sm:$0xff]
        %v214 = vld [vmem:[%s166 + $0xb0] sm:$0xff]
        %v215 = vld [vmem:[%s166 + $0xb8] sm:$0xff]
        %v216 = vld [vmem:[%s166 + $0xc0] sm:$0xff]
        %v217 = vld [vmem:[%s166 + $0xc8] sm:$0xff]
        %v218 = vld [vmem:[%s166 + $0xd0] sm:$0xff]
        %v219 = vld [vmem:[%s166 + $0xd8] sm:$0xff]
        %v220 = vld [vmem:[%s166 + $0xe0] sm:$0xff]
        %v221 = vld [vmem:[%s166 + $0xe8] sm:$0xff]
        %v222 = vld [vmem:[%s166 + $0xf0] sm:$0xff]
        %v223 = vld [vmem:[%s166 + $0xf8] sm:$0xff]
        %v224 = vld [vmem:[%s166 + $0x100] sm:$0xff]
        %v225 = vld [vmem:[%s166 + $0x108] sm:$0xff]
        %v226 = vld [vmem:[%s166 + $0x110] sm:$0xff]
        %v227 = vld [vmem:[%s166 + $0x118] sm:$0xff]
        %v228 = vld [vmem:[%s166 + $0x120] sm:$0xff]
        %v229 = vld [vmem:[%s166 + $0x128] sm:$0xff]
        %v230 = vld [vmem:[%s166 + $0x130] sm:$0xff]
        %v231 = vld [vmem:[%s166 + $0x138] sm:$0xff]
        %v232 = vld [vmem:[%s166 + $0x140] sm:$0xff]
        %v233 = vld [vmem:[%s166 + $0x148] sm:$0xff]
        %v234 = vld [vmem:[%s166 + $0x150] sm:$0xff]
        %v235 = vld [vmem:[%s166 + $0x158] sm:$0xff]
        %v236 = vld [vmem:[%s166 + $0x160] sm:$0xff]
        %v237 = vld [vmem:[%s166 + $0x168] sm:$0xff]
        %v238 = vld [vmem:[%s166 + $0x170] sm:$0xff]
        %v239 = vld [vmem:[%s166 + $0x178] sm:$0xff]
        %v240 = vld [vmem:[%s166 + $0x180] sm:$0x7]
        %v241 = vld [vmem:[%s166 + $0x188] sm:$0x7]
        %v242 = vld [vmem:[%s166 + $0x190] sm:$0x7]
        %v243 = vld [vmem:[%s166 + $0x198] sm:$0x7]
        %v244 = vld [vmem:[%s166 + $0x1a0] sm:$0x7]
        %v245 = vld [vmem:[%s166 + $0x1a8] sm:$0x7]
        %v246 = vld [vmem:[%s166 + $0x1b0] sm:$0x7]
        %v247 = vld [vmem:[%s166 + $0x1b8] sm:$0x7]
        %v248 = vld [vmem:[%s166 + $0x1c0] sm:$0x7]
        %v249 = vld [vmem:[%s166 + $0x1c8] sm:$0x7]
        %v250 = vld [vmem:[%s166 + $0x1d0] sm:$0x7]
        %v251 = vld [vmem:[%s166 + $0x1d8] sm:$0x7]
        %v252 = vld [vmem:[%s166 + $0x1e0] sm:$0x7]
        %v253 = vld [vmem:[%s166 + $0x1e8] sm:$0x7]
        %v254 = vld [vmem:[%s166 + $0x1f0] sm:$0x7]
        %v255 = vld [vmem:[%s166 + $0x1f8] sm:$0x7]
        %v256 = vld [vmem:[%s2] sm:$0xff]
        %258 = vset.pattern.permute.xlu0 0
        %259 = vperm.xlu0 %258, %v256
        %v260 = vpop.permute.xlu0 %259
        %vm262 = vcmask 220160
        %v264 = vsel %vm262, %v191, 0
        %vm266 = vcmask 1042432
        %v268 = vsel %vm266, %v240, 0
        %v271 = vsel %vm266, %v241, 0
        %v274 = vsel %vm266, %v242, 0
        %v277 = vsel %vm266, %v243, 0
        %v280 = vsel %vm266, %v244, 0
        %v283 = vsel %vm266, %v245, 0
        %v286 = vsel %vm266, %v246, 0
        %v289 = vsel %vm266, %v247, 0
        %v292 = vsel %vm266, %v248, 0
        %v295 = vsel %vm266, %v249, 0
        %v298 = vsel %vm266, %v250, 0
        %v301 = vsel %vm266, %v251, 0
        %v304 = vsel %vm266, %v252, 0
        %v307 = vsel %vm266, %v253, 0
        %v310 = vsel %vm266, %v254, 0
        %v313 = vsel %vm266, %v255, 0
        %315 = vmatprep.subr.mxu0 %v193
        %316 = vmatpush1.msra.mxu0 %v192
        %317 = vmatprep.subr.mxu0 %v209
        %318 = vmatpush1.msra.mxu0 %v208
        %319 = vmatprep.subr.mxu0 %v225
        %320 = vmatpush1.msra.mxu0 %v224
        %321 = vmatprep.subr.mxu0 %v271
        %322 = vmatpush1.msra.mxu0 %v268
        %323 = vmatprep.subr.mxu0 0.0
        %324 = vmatpush1.msra.mxu0 0.0
        %325 = vmatprep.subr.mxu0 0.0
        %326 = vmatpush1.msra.mxu0 0.0
        %327 = vmatprep.subr.mxu0 0.0
        %328 = vmatpush1.msra.mxu0 0.0
        %329 = vmatprep.subr.mxu0 0.0
        %330 = vmatpush1.msra.mxu0 0.0
        %331 = vmatprep.subr.mxu0 0.0
        %332 = vmatpush1.msra.mxu0 0.0
        %333 = vmatprep.subr.mxu0 0.0
        %334 = vmatpush1.msra.mxu0 0.0
        %335 = vmatprep.subr.mxu0 0.0
        %336 = vmatpush1.msra.mxu0 0.0
        %337 = vmatprep.subr.mxu0 0.0
        %338 = vmatpush1.msra.mxu0 0.0
        %339 = vmatprep.subr.mxu0 0.0
        %340 = vmatpush1.msra.mxu0 0.0
        %341 = vmatprep.subr.mxu0 0.0
        %342 = vmatpush1.msra.mxu0 0.0
        %343 = vmatprep.subr.mxu0 0.0
        %344 = vmatpush1.msra.mxu0 0.0
        %345 = vmatprep.subr.mxu0 0.0
        %346 = vmatpush1.msra.mxu0 0.0
        %347 = vmatprep.subr.mxu0 0.0
        %348 = vmatpush1.msra.mxu0 0.0
        %349 = vmatprep.subr.mxu0 0.0
        %350 = vmatpush1.msra.mxu0 0.0
        %351 = vmatprep.subr.mxu0 0.0
        %352 = vmatpush1.msra.mxu0 0.0
        %353 = vmatprep.subr.mxu0 0.0
        %354 = vmatpush1.msra.mxu0 0.0
        %355 = vmatprep.subr.mxu0 0.0
        %356 = vmatpush1.msra.mxu0 0.0
        %357 = vmatprep.subr.mxu0 0.0
        %358 = vmatpush1.msra.mxu0 0.0
        %359 = vmatprep.subr.mxu0 0.0
        %360 = vmatpush1.msra.mxu0 0.0
        %361 = vmatprep.subr.mxu0 0.0
        %362 = vmatpush1.msra.mxu0 0.0
        %363 = vmatprep.subr.mxu0 0.0
        %364 = vmatpush1.msra.mxu0 0.0
        %365 = vmatprep.subr.mxu0 0.0
        %366 = vmatpush1.msra.mxu0 0.0
        %367 = vmatprep.subr.mxu0 0.0
        %368 = vmatpush1.msra.mxu0 0.0
        %369 = vmatprep.subr.mxu0 0.0
        %370 = vmatpush1.msra.mxu0 0.0
        %371 = vmatprep.subr.mxu0 0.0
        %372 = vmatpush1.msra.mxu0 0.0
        %373 = vmatprep.subr.mxu0 0.0
        %374 = vmatpush1.msra.mxu0 0.0
        %375 = vmatprep.subr.mxu0 0.0
        %376 = vmatpush1.msra.mxu0 0.0
        %377 = vmatprep.subr.mxu0 0.0
        %378 = vmatpush1.msra.mxu0 0.0
        %379 = vmatprep.mubr.f32.mxu0 0.0
        %380 = vmatmul.mubr.f32.gmra.mrb[0].mxu0 %v264
        %v381 = vpop.f32.mrb[0].mxu0
        %v382 = vadd.f32 %v260, %v381
        %v383 = vpop.f32.mrb[0].mxu0
        %v384 = vadd.f32 %v260, %v383
        %385 = vdwg.mxu0
        %386 = vmatprep.subr.mxu0 %v195
        %387 = vmatpush1.msra.mxu0 %v194
        %388 = vmatprep.subr.mxu0 %v211
        %389 = vmatpush1.msra.mxu0 %v210
        %390 = vmatprep.subr.mxu0 %v227
        %391 = vmatpush1.msra.mxu0 %v226
        %392 = vmatprep.subr.mxu0 %v277
        %393 = vmatpush1.msra.mxu0 %v274
        %394 = vmatprep.subr.mxu0 0.0
        %395 = vmatpush1.msra.mxu0 0.0
        %396 = vmatprep.subr.mxu0 0.0
        %397 = vmatpush1.msra.mxu0 0.0
        %398 = vmatprep.subr.mxu0 0.0
        %399 = vmatpush1.msra.mxu0 0.0
        %400 = vmatprep.subr.mxu0 0.0
        %401 = vmatpush1.msra.mxu0 0.0
        %402 = vmatprep.subr.mxu0 0.0
        %403 = vmatpush1.msra.mxu0 0.0
        %404 = vmatprep.subr.mxu0 0.0
        %405 = vmatpush1.msra.mxu0 0.0
        %406 = vmatprep.subr.mxu0 0.0
        %407 = vmatpush1.msra.mxu0 0.0
        %408 = vmatprep.subr.mxu0 0.0
        %409 = vmatpush1.msra.mxu0 0.0
        %410 = vmatprep.subr.mxu0 0.0
        %411 = vmatpush1.msra.mxu0 0.0
        %412 = vmatprep.subr.mxu0 0.0
        %413 = vmatpush1.msra.mxu0 0.0
        %414 = vmatprep.subr.mxu0 0.0
        %415 = vmatpush1.msra.mxu0 0.0
        %416 = vmatprep.subr.mxu0 0.0
        %417 = vmatpush1.msra.mxu0 0.0
        %418 = vmatprep.subr.mxu0 0.0
        %419 = vmatpush1.msra.mxu0 0.0
        %420 = vmatprep.subr.mxu0 0.0
        %421 = vmatpush1.msra.mxu0 0.0
        %422 = vmatprep.subr.mxu0 0.0
        %423 = vmatpush1.msra.mxu0 0.0
        %424 = vmatprep.subr.mxu0 0.0
        %425 = vmatpush1.msra.mxu0 0.0
        %426 = vmatprep.subr.mxu0 0.0
        %427 = vmatpush1.msra.mxu0 0.0
        %428 = vmatprep.subr.mxu0 0.0
        %429 = vmatpush1.msra.mxu0 0.0
        %430 = vmatprep.subr.mxu0 0.0
        %431 = vmatpush1.msra.mxu0 0.0
        %432 = vmatprep.subr.mxu0 0.0
        %433 = vmatpush1.msra.mxu0 0.0
        %434 = vmatprep.subr.mxu0 0.0
        %435 = vmatpush1.msra.mxu0 0.0
        %436 = vmatprep.subr.mxu0 0.0
        %437 = vmatpush1.msra.mxu0 0.0
        %438 = vmatprep.subr.mxu0 0.0
        %439 = vmatpush1.msra.mxu0 0.0
        %440 = vmatprep.subr.mxu0 0.0
        %441 = vmatpush1.msra.mxu0 0.0
        %442 = vmatprep.subr.mxu0 0.0
        %443 = vmatpush1.msra.mxu0 0.0
        %444 = vmatprep.subr.mxu0 0.0
        %445 = vmatpush1.msra.mxu0 0.0
        %446 = vmatprep.subr.mxu0 0.0
        %447 = vmatpush1.msra.mxu0 0.0
        %448 = vmatprep.subr.mxu0 0.0
        %449 = vmatpush1.msra.mxu0 0.0
        %450 = vmatprep.mubr.f32.mxu0 0.0
        %451 = vmatmul.mubr.f32.gmra.mrb[0].mxu0 %v264
        %v452 = vpop.f32.mrb[0].mxu0
        %v453 = vadd.f32 %v260, %v452
        %v454 = vpop.f32.mrb[0].mxu0
        %v455 = vadd.f32 %v260, %v454
        %456 = vdwg.mxu0
        %457 = vmatprep.subr.mxu0 %v197
        %458 = vmatpush1.msra.mxu0 %v196
        %459 = vmatprep.subr.mxu0 %v213
        %460 = vmatpush1.msra.mxu0 %v212
        %461 = vmatprep.subr.mxu0 %v229
        %462 = vmatpush1.msra.mxu0 %v228
        %463 = vmatprep.subr.mxu0 %v283
        %464 = vmatpush1.msra.mxu0 %v280
        %465 = vmatprep.subr.mxu0 0.0
        %466 = vmatpush1.msra.mxu0 0.0
        %467 = vmatprep.subr.mxu0 0.0
        %468 = vmatpush1.msra.mxu0 0.0
        %469 = vmatprep.subr.mxu0 0.0
        %470 = vmatpush1.msra.mxu0 0.0
        %471 = vmatprep.subr.mxu0 0.0
        %472 = vmatpush1.msra.mxu0 0.0
        %473 = vmatprep.subr.mxu0 0.0
        %474 = vmatpush1.msra.mxu0 0.0
        %475 = vmatprep.subr.mxu0 0.0
        %476 = vmatpush1.msra.mxu0 0.0
        %477 = vmatprep.subr.mxu0 0.0
        %478 = vmatpush1.msra.mxu0 0.0
        %479 = vmatprep.subr.mxu0 0.0
        %480 = vmatpush1.msra.mxu0 0.0
        %481 = vmatprep.subr.mxu0 0.0
        %482 = vmatpush1.msra.mxu0 0.0
        %483 = vmatprep.subr.mxu0 0.0
        %484 = vmatpush1.msra.mxu0 0.0
        %485 = vmatprep.subr.mxu0 0.0
        %486 = vmatpush1.msra.mxu0 0.0
        %487 = vmatprep.subr.mxu0 0.0
        %488 = vmatpush1.msra.mxu0 0.0
        %489 = vmatprep.subr.mxu0 0.0
        %490 = vmatpush1.msra.mxu0 0.0
        %491 = vmatprep.subr.mxu0 0.0
        %492 = vmatpush1.msra.mxu0 0.0
        %493 = vmatprep.subr.mxu0 0.0
        %494 = vmatpush1.msra.mxu0 0.0
        %495 = vmatprep.subr.mxu0 0.0
        %496 = vmatpush1.msra.mxu0 0.0
        %497 = vmatprep.subr.mxu0 0.0
        %498 = vmatpush1.msra.mxu0 0.0
        %499 = vmatprep.subr.mxu0 0.0
        %500 = vmatpush1.msra.mxu0 0.0
        %501 = vmatprep.subr.mxu0 0.0
        %502 = vmatpush1.msra.mxu0 0.0
        %503 = vmatprep.subr.mxu0 0.0
        %504 = vmatpush1.msra.mxu0 0.0
        %505 = vmatprep.subr.mxu0 0.0
        %506 = vmatpush1.msra.mxu0 0.0
        %507 = vmatprep.subr.mxu0 0.0
        %508 = vmatpush1.msra.mxu0 0.0
        %509 = vmatprep.subr.mxu0 0.0
        %510 = vmatpush1.msra.mxu0 0.0
        %511 = vmatprep.subr.mxu0 0.0
        %512 = vmatpush1.msra.mxu0 0.0
        %513 = vmatprep.subr.mxu0 0.0
        %514 = vmatpush1.msra.mxu0 0.0
        %515 = vmatprep.subr.mxu0 0.0
        %516 = vmatpush1.msra.mxu0 0.0
        %517 = vmatprep.subr.mxu0 0.0
        %518 = vmatpush1.msra.mxu0 0.0
        %519 = vmatprep.subr.mxu0 0.0
        %520 = vmatpush1.msra.mxu0 0.0
        %521 = vmatprep.mubr.f32.mxu0 0.0
        %522 = vmatmul.mubr.f32.gmra.mrb[0].mxu0 %v264
        %v523 = vpop.f32.mrb[0].mxu0
        %v524 = vadd.f32 %v260, %v523
        %v525 = vpop.f32.mrb[0].mxu0
        %v526 = vadd.f32 %v260, %v525
        %527 = vdwg.mxu0
        %528 = vmatprep.subr.mxu0 %v199
        %529 = vmatpush1.msra.mxu0 %v198
        %530 = vmatprep.subr.mxu0 %v215
        %531 = vmatpush1.msra.mxu0 %v214
        %532 = vmatprep.subr.mxu0 %v231
        %533 = vmatpush1.msra.mxu0 %v230
        %534 = vmatprep.subr.mxu0 %v289
        %535 = vmatpush1.msra.mxu0 %v286
        %536 = vmatprep.subr.mxu0 0.0
        %537 = vmatpush1.msra.mxu0 0.0
        %538 = vmatprep.subr.mxu0 0.0
        %539 = vmatpush1.msra.mxu0 0.0
        %540 = vmatprep.subr.mxu0 0.0
        %541 = vmatpush1.msra.mxu0 0.0
        %542 = vmatprep.subr.mxu0 0.0
        %543 = vmatpush1.msra.mxu0 0.0
        %544 = vmatprep.subr.mxu0 0.0
        %545 = vmatpush1.msra.mxu0 0.0
        %546 = vmatprep.subr.mxu0 0.0
        %547 = vmatpush1.msra.mxu0 0.0
        %548 = vmatprep.subr.mxu0 0.0
        %549 = vmatpush1.msra.mxu0 0.0
        %550 = vmatprep.subr.mxu0 0.0
        %551 = vmatpush1.msra.mxu0 0.0
        %552 = vmatprep.subr.mxu0 0.0
        %553 = vmatpush1.msra.mxu0 0.0
        %554 = vmatprep.subr.mxu0 0.0
        %555 = vmatpush1.msra.mxu0 0.0
        %556 = vmatprep.subr.mxu0 0.0
        %557 = vmatpush1.msra.mxu0 0.0
        %558 = vmatprep.subr.mxu0 0.0
        %559 = vmatpush1.msra.mxu0 0.0
        %560 = vmatprep.subr.mxu0 0.0
        %561 = vmatpush1.msra.mxu0 0.0
        %562 = vmatprep.subr.mxu0 0.0
        %563 = vmatpush1.msra.mxu0 0.0
        %564 = vmatprep.subr.mxu0 0.0
        %565 = vmatpush1.msra.mxu0 0.0
        %566 = vmatprep.subr.mxu0 0.0
        %567 = vmatpush1.msra.mxu0 0.0
        %568 = vmatprep.subr.mxu0 0.0
        %569 = vmatpush1.msra.mxu0 0.0
        %570 = vmatprep.subr.mxu0 0.0
        %571 = vmatpush1.msra.mxu0 0.0
        %572 = vmatprep.subr.mxu0 0.0
        %573 = vmatpush1.msra.mxu0 0.0
        %574 = vmatprep.subr.mxu0 0.0
        %575 = vmatpush1.msra.mxu0 0.0
        %576 = vmatprep.subr.mxu0 0.0
        %577 = vmatpush1.msra.mxu0 0.0
        %578 = vmatprep.subr.mxu0 0.0
        %579 = vmatpush1.msra.mxu0 0.0
        %580 = vmatprep.subr.mxu0 0.0
        %581 = vmatpush1.msra.mxu0 0.0
        %582 = vmatprep.subr.mxu0 0.0
        %583 = vmatpush1.msra.mxu0 0.0
        %584 = vmatprep.subr.mxu0 0.0
        %585 = vmatpush1.msra.mxu0 0.0
        %586 = vmatprep.subr.mxu0 0.0
        %587 = vmatpush1.msra.mxu0 0.0
        %588 = vmatprep.subr.mxu0 0.0
        %589 = vmatpush1.msra.mxu0 0.0
        %590 = vmatprep.subr.mxu0 0.0
        %591 = vmatpush1.msra.mxu0 0.0
        %592 = vmatprep.mubr.f32.mxu0 0.0
        %593 = vmatmul.mubr.f32.gmra.mrb[0].mxu0 %v264
        %v594 = vpop.f32.mrb[0].mxu0
        %v595 = vadd.f32 %v260, %v594
        %v596 = vpop.f32.mrb[0].mxu0
        %v597 = vadd.f32 %v260, %v596
        %598 = vdwg.mxu0
        %599 = vmatprep.subr.mxu0 %v201
        %600 = vmatpush1.msra.mxu0 %v200
        %601 = vmatprep.subr.mxu0 %v217
        %602 = vmatpush1.msra.mxu0 %v216
        %603 = vmatprep.subr.mxu0 %v233
        %604 = vmatpush1.msra.mxu0 %v232
        %605 = vmatprep.subr.mxu0 %v295
        %606 = vmatpush1.msra.mxu0 %v292
        %607 = vmatprep.subr.mxu0 0.0
        %608 = vmatpush1.msra.mxu0 0.0
        %609 = vmatprep.subr.mxu0 0.0
        %610 = vmatpush1.msra.mxu0 0.0
        %611 = vmatprep.subr.mxu0 0.0
        %612 = vmatpush1.msra.mxu0 0.0
        %613 = vmatprep.subr.mxu0 0.0
        %614 = vmatpush1.msra.mxu0 0.0
        %615 = vmatprep.subr.mxu0 0.0
        %616 = vmatpush1.msra.mxu0 0.0
        %617 = vmatprep.subr.mxu0 0.0
        %618 = vmatpush1.msra.mxu0 0.0
        %619 = vmatprep.subr.mxu0 0.0
        %620 = vmatpush1.msra.mxu0 0.0
        %621 = vmatprep.subr.mxu0 0.0
        %622 = vmatpush1.msra.mxu0 0.0
        %623 = vmatprep.subr.mxu0 0.0
        %624 = vmatpush1.msra.mxu0 0.0
        %625 = vmatprep.subr.mxu0 0.0
        %626 = vmatpush1.msra.mxu0 0.0
        %627 = vmatprep.subr.mxu0 0.0
        %628 = vmatpush1.msra.mxu0 0.0
        %629 = vmatprep.subr.mxu0 0.0
        %630 = vmatpush1.msra.mxu0 0.0
        %631 = vmatprep.subr.mxu0 0.0
        %632 = vmatpush1.msra.mxu0 0.0
        %633 = vmatprep.subr.mxu0 0.0
        %634 = vmatpush1.msra.mxu0 0.0
        %635 = vmatprep.subr.mxu0 0.0
        %636 = vmatpush1.msra.mxu0 0.0
        %637 = vmatprep.subr.mxu0 0.0
        %638 = vmatpush1.msra.mxu0 0.0
        %639 = vmatprep.subr.mxu0 0.0
        %640 = vmatpush1.msra.mxu0 0.0
        %641 = vmatprep.subr.mxu0 0.0
        %642 = vmatpush1.msra.mxu0 0.0
        %643 = vmatprep.subr.mxu0 0.0
        %644 = vmatpush1.msra.mxu0 0.0
        %645 = vmatprep.subr.mxu0 0.0
        %646 = vmatpush1.msra.mxu0 0.0
        %647 = vmatprep.subr.mxu0 0.0
        %648 = vmatpush1.msra.mxu0 0.0
        %649 = vmatprep.subr.mxu0 0.0
        %650 = vmatpush1.msra.mxu0 0.0
        %651 = vmatprep.subr.mxu0 0.0
        %652 = vmatpush1.msra.mxu0 0.0
        %653 = vmatprep.subr.mxu0 0.0
        %654 = vmatpush1.msra.mxu0 0.0
        %655 = vmatprep.subr.mxu0 0.0
        %656 = vmatpush1.msra.mxu0 0.0
        %657 = vmatprep.subr.mxu0 0.0
        %658 = vmatpush1.msra.mxu0 0.0
        %659 = vmatprep.subr.mxu0 0.0
        %660 = vmatpush1.msra.mxu0 0.0
        %661 = vmatprep.subr.mxu0 0.0
        %662 = vmatpush1.msra.mxu0 0.0
        %663 = vmatprep.mubr.f32.mxu0 0.0
        %664 = vmatmul.mubr.f32.gmra.mrb[0].mxu0 %v264
        %v665 = vpop.f32.mrb[0].mxu0
        %v666 = vadd.f32 %v260, %v665
        %v667 = vpop.f32.mrb[0].mxu0
        %v668 = vadd.f32 %v260, %v667
        %669 = vdwg.mxu0
        %670 = vmatprep.subr.mxu0 %v203
        %671 = vmatpush1.msra.mxu0 %v202
        %672 = vmatprep.subr.mxu0 %v219
        %673 = vmatpush1.msra.mxu0 %v218
        %674 = vmatprep.subr.mxu0 %v235
        %675 = vmatpush1.msra.mxu0 %v234
        %676 = vmatprep.subr.mxu0 %v301
        %677 = vmatpush1.msra.mxu0 %v298
        %678 = vmatprep.subr.mxu0 0.0
        %679 = vmatpush1.msra.mxu0 0.0
        %680 = vmatprep.subr.mxu0 0.0
        %681 = vmatpush1.msra.mxu0 0.0
        %682 = vmatprep.subr.mxu0 0.0
        %683 = vmatpush1.msra.mxu0 0.0
        %684 = vmatprep.subr.mxu0 0.0
        %685 = vmatpush1.msra.mxu0 0.0
        %686 = vmatprep.subr.mxu0 0.0
        %687 = vmatpush1.msra.mxu0 0.0
        %688 = vmatprep.subr.mxu0 0.0
        %689 = vmatpush1.msra.mxu0 0.0
        %690 = vmatprep.subr.mxu0 0.0
        %691 = vmatpush1.msra.mxu0 0.0
        %692 = vmatprep.subr.mxu0 0.0
        %693 = vmatpush1.msra.mxu0 0.0
        %694 = vmatprep.subr.mxu0 0.0
        %695 = vmatpush1.msra.mxu0 0.0
        %696 = vmatprep.subr.mxu0 0.0
        %697 = vmatpush1.msra.mxu0 0.0
        %698 = vmatprep.subr.mxu0 0.0
        %699 = vmatpush1.msra.mxu0 0.0
        %700 = vmatprep.subr.mxu0 0.0
        %701 = vmatpush1.msra.mxu0 0.0
        %702 = vmatprep.subr.mxu0 0.0
        %703 = vmatpush1.msra.mxu0 0.0
        %704 = vmatprep.subr.mxu0 0.0
        %705 = vmatpush1.msra.mxu0 0.0
        %706 = vmatprep.subr.mxu0 0.0
        %707 = vmatpush1.msra.mxu0 0.0
        %708 = vmatprep.subr.mxu0 0.0
        %709 = vmatpush1.msra.mxu0 0.0
        %710 = vmatprep.subr.mxu0 0.0
        %711 = vmatpush1.msra.mxu0 0.0
        %712 = vmatprep.subr.mxu0 0.0
        %713 = vmatpush1.msra.mxu0 0.0
        %714 = vmatprep.subr.mxu0 0.0
        %715 = vmatpush1.msra.mxu0 0.0
        %716 = vmatprep.subr.mxu0 0.0
        %717 = vmatpush1.msra.mxu0 0.0
        %718 = vmatprep.subr.mxu0 0.0
        %719 = vmatpush1.msra.mxu0 0.0
        %720 = vmatprep.subr.mxu0 0.0
        %721 = vmatpush1.msra.mxu0 0.0
        %722 = vmatprep.subr.mxu0 0.0
        %723 = vmatpush1.msra.mxu0 0.0
        %724 = vmatprep.subr.mxu0 0.0
        %725 = vmatpush1.msra.mxu0 0.0
        %726 = vmatprep.subr.mxu0 0.0
        %727 = vmatpush1.msra.mxu0 0.0
        %728 = vmatprep.subr.mxu0 0.0
        %729 = vmatpush1.msra.mxu0 0.0
        %730 = vmatprep.subr.mxu0 0.0
        %731 = vmatpush1.msra.mxu0 0.0
        %732 = vmatprep.subr.mxu0 0.0
        %733 = vmatpush1.msra.mxu0 0.0
        %734 = vmatprep.mubr.f32.mxu0 0.0
        %735 = vmatmul.mubr.f32.gmra.mrb[0].mxu0 %v264
        %v736 = vpop.f32.mrb[0].mxu0
        %v737 = vadd.f32 %v260, %v736
        %v738 = vpop.f32.mrb[0].mxu0
        %v739 = vadd.f32 %v260, %v738
        %740 = vdwg.mxu0
        %741 = vmatprep.subr.mxu0 %v205
        %742 = vmatpush1.msra.mxu0 %v204
        %743 = vmatprep.subr.mxu0 %v221
        %744 = vmatpush1.msra.mxu0 %v220
        %745 = vmatprep.subr.mxu0 %v237
        %746 = vmatpush1.msra.mxu0 %v236
        %747 = vmatprep.subr.mxu0 %v307
        %748 = vmatpush1.msra.mxu0 %v304
        %749 = vmatprep.subr.mxu0 0.0
        %750 = vmatpush1.msra.mxu0 0.0
        %751 = vmatprep.subr.mxu0 0.0
        %752 = vmatpush1.msra.mxu0 0.0
        %753 = vmatprep.subr.mxu0 0.0
        %754 = vmatpush1.msra.mxu0 0.0
        %755 = vmatprep.subr.mxu0 0.0
        %756 = vmatpush1.msra.mxu0 0.0
        %757 = vmatprep.subr.mxu0 0.0
        %758 = vmatpush1.msra.mxu0 0.0
        %759 = vmatprep.subr.mxu0 0.0
        %760 = vmatpush1.msra.mxu0 0.0
        %761 = vmatprep.subr.mxu0 0.0
        %762 = vmatpush1.msra.mxu0 0.0
        %763 = vmatprep.subr.mxu0 0.0
        %764 = vmatpush1.msra.mxu0 0.0
        %765 = vmatprep.subr.mxu0 0.0
        %766 = vmatpush1.msra.mxu0 0.0
        %767 = vmatprep.subr.mxu0 0.0
        %768 = vmatpush1.msra.mxu0 0.0
        %769 = vmatprep.subr.mxu0 0.0
        %770 = vmatpush1.msra.mxu0 0.0
        %771 = vmatprep.subr.mxu0 0.0
        %772 = vmatpush1.msra.mxu0 0.0
        %773 = vmatprep.subr.mxu0 0.0
        %774 = vmatpush1.msra.mxu0 0.0
        %775 = vmatprep.subr.mxu0 0.0
        %776 = vmatpush1.msra.mxu0 0.0
        %777 = vmatprep.subr.mxu0 0.0
        %778 = vmatpush1.msra.mxu0 0.0
        %779 = vmatprep.subr.mxu0 0.0
        %780 = vmatpush1.msra.mxu0 0.0
        %781 = vmatprep.subr.mxu0 0.0
        %782 = vmatpush1.msra.mxu0 0.0
        %783 = vmatprep.subr.mxu0 0.0
        %784 = vmatpush1.msra.mxu0 0.0
        %785 = vmatprep.subr.mxu0 0.0
        %786 = vmatpush1.msra.mxu0 0.0
        %787 = vmatprep.subr.mxu0 0.0
        %788 = vmatpush1.msra.mxu0 0.0
        %789 = vmatprep.subr.mxu0 0.0
        %790 = vmatpush1.msra.mxu0 0.0
        %791 = vmatprep.subr.mxu0 0.0
        %792 = vmatpush1.msra.mxu0 0.0
        %793 = vmatprep.subr.mxu0 0.0
        %794 = vmatpush1.msra.mxu0 0.0
        %795 = vmatprep.subr.mxu0 0.0
        %796 = vmatpush1.msra.mxu0 0.0
        %797 = vmatprep.subr.mxu0 0.0
        %798 = vmatpush1.msra.mxu0 0.0
        %799 = vmatprep.subr.mxu0 0.0
        %800 = vmatpush1.msra.mxu0 0.0
        %801 = vmatprep.subr.mxu0 0.0
        %802 = vmatpush1.msra.mxu0 0.0
        %803 = vmatprep.subr.mxu0 0.0
        %804 = vmatpush1.msra.mxu0 0.0
        %805 = vmatprep.mubr.f32.mxu0 0.0
        %806 = vmatmul.mubr.f32.gmra.mrb[0].mxu0 %v264
        %v807 = vpop.f32.mrb[0].mxu0
        %v808 = vadd.f32 %v260, %v807
        %v809 = vpop.f32.mrb[0].mxu0
        %v810 = vadd.f32 %v260, %v809
        %811 = vdwg.mxu0
        %812 = vmatprep.subr.mxu0 %v207
        %813 = vmatpush1.msra.mxu0 %v206
        %814 = vmatprep.subr.mxu0 %v223
        %815 = vmatpush1.msra.mxu0 %v222
        %816 = vmatprep.subr.mxu0 %v239
        %817 = vmatpush1.msra.mxu0 %v238
        %818 = vmatprep.subr.mxu0 %v313
        %819 = vmatpush1.msra.mxu0 %v310
        %820 = vmatprep.subr.mxu0 0.0
        %821 = vmatpush1.msra.mxu0 0.0
        %822 = vmatprep.subr.mxu0 0.0
        %823 = vmatpush1.msra.mxu0 0.0
        %824 = vmatprep.subr.mxu0 0.0
        %825 = vmatpush1.msra.mxu0 0.0
        %826 = vmatprep.subr.mxu0 0.0
        %827 = vmatpush1.msra.mxu0 0.0
        %828 = vmatprep.subr.mxu0 0.0
        %829 = vmatpush1.msra.mxu0 0.0
        %830 = vmatprep.subr.mxu0 0.0
        %831 = vmatpush1.msra.mxu0 0.0
        %832 = vmatprep.subr.mxu0 0.0
        %833 = vmatpush1.msra.mxu0 0.0
        %834 = vmatprep.subr.mxu0 0.0
        %835 = vmatpush1.msra.mxu0 0.0
        %836 = vmatprep.subr.mxu0 0.0
        %837 = vmatpush1.msra.mxu0 0.0
        %838 = vmatprep.subr.mxu0 0.0
        %839 = vmatpush1.msra.mxu0 0.0
        %840 = vmatprep.subr.mxu0 0.0
        %841 = vmatpush1.msra.mxu0 0.0
        %842 = vmatprep.subr.mxu0 0.0
        %843 = vmatpush1.msra.mxu0 0.0
        %844 = vmatprep.subr.mxu0 0.0
        %845 = vmatpush1.msra.mxu0 0.0
        %846 = vmatprep.subr.mxu0 0.0
        %847 = vmatpush1.msra.mxu0 0.0
        %848 = vmatprep.subr.mxu0 0.0
        %849 = vmatpush1.msra.mxu0 0.0
        %850 = vmatprep.subr.mxu0 0.0
        %851 = vmatpush1.msra.mxu0 0.0
        %852 = vmatprep.subr.mxu0 0.0
        %853 = vmatpush1.msra.mxu0 0.0
        %854 = vmatprep.subr.mxu0 0.0
        %855 = vmatpush1.msra.mxu0 0.0
        %856 = vmatprep.subr.mxu0 0.0
        %857 = vmatpush1.msra.mxu0 0.0
        %858 = vmatprep.subr.mxu0 0.0
        %859 = vmatpush1.msra.mxu0 0.0
        %860 = vmatprep.subr.mxu0 0.0
        %861 = vmatpush1.msra.mxu0 0.0
        %862 = vmatprep.subr.mxu0 0.0
        %863 = vmatpush1.msra.mxu0 0.0
        %864 = vmatprep.subr.mxu0 0.0
        %865 = vmatpush1.msra.mxu0 0.0
        %866 = vmatprep.subr.mxu0 0.0
        %867 = vmatpush1.msra.mxu0 0.0
        %868 = vmatprep.subr.mxu0 0.0
        %869 = vmatpush1.msra.mxu0 0.0
        %870 = vmatprep.subr.mxu0 0.0
        %871 = vmatpush1.msra.mxu0 0.0
        %872 = vmatprep.subr.mxu0 0.0
        %873 = vmatpush1.msra.mxu0 0.0
        %874 = vmatprep.subr.mxu0 0.0
        %875 = vmatpush1.msra.mxu0 0.0
        %876 = vmatprep.mubr.f32.mxu0 0.0
        %877 = vmatmul.mubr.f32.gmra.mrb[0].mxu0 %v264
        %v878 = vpop.f32.mrb[0].mxu0
        %v879 = vadd.f32 %v260, %v878
        %v880 = vpop.f32.mrb[0].mxu0
        %v881 = vadd.f32 %v260, %v880
        %882 = vdwg.mxu0
        %v883 = vmax.f32 %v382, 0.0
        %v884 = vmax.f32 %v384, 0.0
        %v885 = vmax.f32 %v453, 0.0
        %v886 = vmax.f32 %v455, 0.0
        %v887 = vmax.f32 %v524, 0.0
        %v888 = vmax.f32 %v526, 0.0
        %v889 = vmax.f32 %v595, 0.0
        %v890 = vmax.f32 %v597, 0.0
        %v891 = vmax.f32 %v666, 0.0
        %v892 = vmax.f32 %v668, 0.0
        %v893 = vmax.f32 %v737, 0.0
        %v894 = vmax.f32 %v739, 0.0
        %v895 = vmax.f32 %v808, 0.0
        %v896 = vmax.f32 %v810, 0.0
        %v897 = vmax.f32 %v879, 0.0
        %v898 = vmax.f32 %v881, 0.0
        %899 = vst [vmem:[%s188] sm:$0xff] %v883
        %900 = vst [vmem:[%s188 + $0x8] sm:$0xff] %v884
        %901 = vst [vmem:[%s188 + $0x10] sm:$0xff] %v885
        %902 = vst [vmem:[%s188 + $0x18] sm:$0xff] %v886
        %903 = vst [vmem:[%s188 + $0x20] sm:$0xff] %v887
        %904 = vst [vmem:[%s188 + $0x28] sm:$0xff] %v888
        %905 = vst [vmem:[%s188 + $0x30] sm:$0xff] %v889
        %906 = vst [vmem:[%s188 + $0x38] sm:$0xff] %v890
        %907 = vst [vmem:[%s188 + $0x40] sm:$0xff] %v891
        %908 = vst [vmem:[%s188 + $0x48] sm:$0xff] %v892
        %909 = vst [vmem:[%s188 + $0x50] sm:$0xff] %v893
        %910 = vst [vmem:[%s188 + $0x58] sm:$0xff] %v894
        %911 = vst [vmem:[%s188 + $0x60] sm:$0xff] %v895
        %912 = vst [vmem:[%s188 + $0x68] sm:$0xff] %v896
        %913 = vst [vmem:[%s188 + $0x70] sm:$0xff] %v897
        %914 = vst [vmem:[%s188 + $0x78] sm:$0xff] %v898
        %s915 = sand.u32 %s96, 1
        %s916 = scalar_lea.sflag [#allocation4], %s915
        %s917 = sand.u32 %s96, 1
        %s918 = smul.addr %s917, 128
        %s919 = scalar_lea.vmem [#allocation5], %s918
        // Predicated region
        $region37: #{tpu_custom_call.1} parent=31 // pred_check
          %p920 = pneg %p106
        $region38: #{tpu_custom_call.1} parent=31 // pred_check_branch
          %922 = sbr.rel (%p920) target = $region40
        $region39: #{tpu_custom_call.1} parent=31 // pred_region
          %s923 = smul.u32 16, %s20
          %s925 = ssub.s32 2048, 2048
          %926 = vsyncadd %s916, %s925
          %s927 = smul.addr %s923, 128
          %s928 = scalar_lea.hbm %s3, %s927
          %s930 = sshll.u32 %s919, 4
          %s931 = int_to_ptr.vmem [resolvable:$true] %s930
          %933 = dma.vmem_to_hbm [thread:$0]  %s931, 2048, %s928, %s916
        $region40: #{tpu_custom_call.1} parent=31 // pred_fallthru
          _
      $region32: #{tpu_custom_call.1} parent=5 // pred_fallthru
        _
      %p934 = scmp.le.s32.totalorder 2, %s15
      // Predicated region
      $region41: #{tpu_custom_call.1} parent=5 // pred_check
        %p935 = pneg %p934
      $region42: #{tpu_custom_call.1} parent=5 // pred_check_branch
        %937 = sbr.rel (%p935) target = $region44
      $region43: #{tpu_custom_call.1} parent=5 // pred_region
        %s938 = ssub.s32 %s15, 2
        // Predicated region
        $region45: #{tpu_custom_call.1} parent=43 // pred_check
          %p939 = pneg %p112
        $region46: #{tpu_custom_call.1} parent=43 // pred_check_branch
          %941 = sbr.rel (%p939) target = $region48
        $region47: #{tpu_custom_call.1} parent=43 // pred_region
          %s942 = sand.u32 %s97, 1
          %s943 = scalar_lea.sflag [#allocation4], %s942
          %s944 = sand.u32 %s97, 1
          %s945 = smul.addr %s944, 128
          %s946 = scalar_lea.vmem [#allocation5], %s945
          %947 = dma.done %s943, 2048
        $region48: #{tpu_custom_call.1} parent=43 // pred_fallthru
          _
      $region44: #{tpu_custom_call.1} parent=5 // pred_fallthru
        _
    $region6: #{tpu_custom_call.1} parent=1 // loop_footer
      %s19 = sadd.s32 1, %s15
    $region7: #{tpu_custom_call.1} parent=1 // loop_footer_branch
      %14 = sbr.rel target = $region3
    $region8: #{tpu_custom_call.1} parent=1 // loop_exit
      _
    %948 = vsyncpa [#allocation3], 1
    %s949 = scalar_lea.sflag [#allocation3], 1
    %950 = vsyncpa %s949, 1
    %951 = vsyncpa [#allocation4], 1
    %s952 = scalar_lea.sflag [#allocation4], 1
    %953 = vsyncpa %s952, 1

</llo_original>
